<compile_context>
chip_gen: v7x
topology: tpu7x:2x2x1
jax: 0.10.0
libtpu: 0.0.40
codegen_flags: <defaults>
</compile_context>

<pallas_src>
import jax
import jax.numpy as jnp
from jax.experimental import pallas as pl
from jax.experimental.pallas import tpu as pltpu


def _round_up(a, b):
    return (a + b - 1) // b * b


def _recon_head_kernel(x_ref, w1_ref, b1_ref, w2_ref, b2_ref, o_ref):
    # x_ref:  (tm, f*D)   folded row tile (f original rows packed along the lane axis)
    # w1_ref: (f*D, f*D)  block-diagonal W1, resident across the grid
    # b1_ref: (1, f*D)    float32 bias (tiled f times)
    # w2_ref: (f*D, f*P)  block-diagonal W2, resident
    # b2_ref: (1, f*P)    float32 bias (tiled f times)
    # o_ref:  (tm, f*P)   lane-dense output tile
    x = x_ref[...]

    # Linear 1 on the MXU with f32 accumulation; f32 bias add fuses with the accumulator.
    h = jnp.dot(x, w1_ref[...], preferred_element_type=jnp.float32) + b1_ref[...]

    # ELU(alpha=1): h if h > 0 else expm1(h).  exp(min(h,0)) - 1 equals expm1 on the branch
    # that is selected and never overflows on the discarded branch.
    h = jnp.where(h > 0.0, h, jnp.exp(jnp.minimum(h, 0.0)) - 1.0)

    # Linear 2 on the MXU.  Cast the activation (not the resident weight); no-op for f32.
    y = jnp.dot(h.astype(w2_ref.dtype), w2_ref[...],
                preferred_element_type=jnp.float32) + b2_ref[...]

    o_ref[...] = y.astype(o_ref.dtype)
    # Dropout layers are identity at inference time (eval mode).


def _choose_fold(M, d_model, patch, itemsize, max_fold=8):
    """Largest fold f dividing M whose block-diagonal params stay within a small budget."""
    for f in (8, 4, 2):
        if f > max_fold or M % f:
            continue
        kd, pd = f * d_model, f * patch
        wbytes = (kd * kd + kd * pd) * itemsize + (kd + pd) * 4
        if 2 * wbytes > (8 << 20):      # double-buffered resident params must stay small
            continue
        return f
    return 1


def recon_head(x, w1, b1, w2, b2, *, fold=None, tile_bytes_target=2 << 20):
    """x: (..., d_model) -> (..., patch_length); ReconHead.forward in eval mode."""
    *lead, d_model = x.shape
    patch = w2.shape[1]
    M = 1
    for s in lead:
        M *= s

    dtype = x.dtype
    itemsize = jnp.dtype(dtype).itemsize

    # --- fold factor (lane-dense output / MXU-filling relayout) ---
    if fold is None:
        max_fold = 8
        try:
            kind = jax.devices()[0].device_kind.lower()
            # v7x's ~3.2 TB/s HBM moves the roofline ridge left; with 16-bit operands a
            # fold of 8 would flip this kernel MXU-bound, so cap the fold there.
            if ("7" in kind) and itemsize <= 2:
                max_fold = 4
        except Exception:
            pass
        fold = _choose_fold(M, d_model, patch, itemsize, max_fold)
    f = max(1, int(fold))
    if M % f:
        f = 1
    Kd, Pd = f * d_model, f * patch
    Mf = M // f

    # --- parameters: cast ONCE, build block-diagonal weights / tiled biases ONCE ---
    w1c = w1.astype(dtype)
    w2c = w2.astype(dtype)
    if f > 1:
        eye = jnp.eye(f, dtype=dtype)
        w1c = jnp.kron(eye, w1c)          # (f*D, f*D) block-diagonal (exact zeros off-diag)
        w2c = jnp.kron(eye, w2c)          # (f*D, f*P)
    b1c = jnp.tile(b1.reshape(1, d_model).astype(jnp.float32), (1, f))   # f32: fuses with acc
    b2c = jnp.tile(b2.reshape(1, patch).astype(jnp.float32), (1, f))

    # Folded input: pure row-major reshape (free), no full-array padding.
    x2 = x.reshape(Mf, Kd)

    row_align = max(8, 8 * (4 // max(1, itemsize)))   # 8 rows f32, 16 bf16, 32 int8
    row_bytes = Kd * itemsize

    # --- tile selection (HBM-bound op) ---
    # ~2 MiB of x per grid step so the BlockSpec pipeline sits near the HBM roofline.
    tm_eff = max(row_align, (tile_bytes_target // row_bytes) // row_align * row_align)
    tm_eff = min(tm_eff, _round_up(Mf, row_align))
    if Mf * row_bytes >= 8 * (1 << 20):
        # keep >= 8 grid steps: pipelining on both v7x TensorCores, 4+ steps per core
        tm_eff = min(tm_eff, _round_up(pl.cdiv(Mf, 8), row_align))
    elif Mf > row_align:
        # at least 2 steps so both v7x TensorCores get work
        tm_eff = min(tm_eff, _round_up(pl.cdiv(Mf, 2), row_align))
    tm_eff = max(row_align, tm_eff)

    # VMEM budget: double-buffered x/out tiles + double-buffered resident params + f32
    # intermediate activation + headroom.
    param_bytes = (Kd * Kd + Kd * Pd) * itemsize + (Kd + Pd) * 4

    def _need(tm):
        tile = tm * (Kd + Pd) * itemsize
        h_f32 = tm * Kd * 4
        return 2 * tile + 2 * param_bytes + h_f32 + (2 << 20)

    while _need(tm_eff) > (40 << 20) and tm_eff > row_align:
        tm_eff = max(row_align, (tm_eff // 2) // row_align * row_align)

    # Prefer a tile that divides Mf (no ragged tail) when one exists nearby; otherwise the
    # pipeline's masked tail block handles the remainder (no jnp.pad, no output slice copy).
    if Mf % tm_eff:
        lo = max(row_align, (tm_eff // 2) // row_align * row_align)
        for cand in range(tm_eff, lo - 1, -row_align):
            if Mf % cand == 0:
                tm_eff = cand
                break
    grid_n = pl.cdiv(Mf, tm_eff)

    need = _need(tm_eff)
    compiler_kwargs = dict(dimension_semantics=("parallel",))
    if need > (12 << 20):
        try:
            phys = int(pltpu.get_tpu_info().vmem_capacity_bytes)
        except Exception:
            phys = 64 << 20                     # assume the smallest (v7x) physical VMEM
        cap = min(48 << 20, max(need, phys - (16 << 20)))
        compiler_kwargs["vmem_limit_bytes"] = int(min(2 * need, cap))

    out = pl.pallas_call(
        _recon_head_kernel,
        out_shape=jax.ShapeDtypeStruct((Mf, Pd), dtype),
        grid_spec=pl.GridSpec(
            grid=(grid_n,),
            in_specs=[
                pl.BlockSpec((tm_eff, Kd), lambda i: (i, 0)),   # folded x row tile
                pl.BlockSpec((Kd, Kd), lambda i: (0, 0)),       # block-diag W1 (resident)
                pl.BlockSpec((1, Kd), lambda i: (0, 0)),        # b1 (f32)
                pl.BlockSpec((Kd, Pd), lambda i: (0, 0)),       # block-diag W2 (resident)
                pl.BlockSpec((1, Pd), lambda i: (0, 0)),        # b2 (f32)
            ],
            out_specs=pl.BlockSpec((tm_eff, Pd), lambda i: (i, 0)),
        ),
        compiler_params=pltpu.CompilerParams(**compiler_kwargs),
    )(x2, w1c, b1c, w2c, b2c)

    return out.reshape(M, patch).reshape(*lead, patch)


def init_recon_head_params(key, d_model, patch_length, dtype=jnp.float32):
    """Deterministic init matching ReconHead's two Linear layers.

    PyTorch stores Linear weight as (out, in); here they are (in, out) so the kernel
    computes x @ W (equivalent to x @ weight.T in torch)."""
    k1, k2, k3, k4 = jax.random.split(key, 4)
    bound = 1.0 / (d_model ** 0.5)
    w1 = jax.random.uniform(k1, (d_model, d_model), dtype, -bound, bound)
    b1 = jax.random.uniform(k2, (1, d_model), dtype, -bound, bound)
    w2 = jax.random.uniform(k3, (d_model, patch_length), dtype, -bound, bound)
    b2 = jax.random.uniform(k4, (1, patch_length), dtype, -bound, bound)
    return w1, b1, w2, b2


def recon_head_reference(x, w1, b1, w2, b2):
    """Pure-JAX reference of the PyTorch forward (eval mode)."""
    xf = x.astype(jnp.float32)
    h = xf @ w1.astype(jnp.float32) + b1.reshape(1, -1).astype(jnp.float32)
    h = jnp.where(h > 0, h, jnp.exp(jnp.minimum(h, 0.0)) - 1.0)
    y = h @ w2.astype(jnp.float32) + b2.reshape(1, -1).astype(jnp.float32)
    return y.astype(x.dtype)


if __name__ == "__main__":
    key = jax.random.PRNGKey(0)
    k_x, k_p = jax.random.split(key)

    # Shapes consistent with the module (config defaults d_model=64, patch_length=16):
    #   input (batch=2, channels=4, num_patches=8, d_model=64)
    batch, channels, num_patches, d_model, patch_length = 2, 4, 8, 64, 16
    x = jax.random.normal(k_x, (batch, channels, num_patches, d_model), jnp.float32)
    w1, b1, w2, b2 = init_recon_head_params(k_p, d_model, patch_length)

    y = recon_head(x, w1, b1, w2, b2)
    y = jax.block_until_ready(y)
    y_ref = recon_head_reference(x, w1, b1, w2, b2)
    assert y.shape == (batch, channels, num_patches, patch_length), y.shape
    err = float(jnp.max(jnp.abs(y.astype(jnp.float32) - y_ref.astype(jnp.float32))))
    assert err < 1e-4, err

    # Second case: leading size not a multiple of 8 -> fold=4, multi-step grid with a
    # ragged last block (exercises the no-padding tail path).
    x_b = jax.random.normal(k_x, (3, 5, 4, d_model), jnp.float32)
    y_b = jax.block_until_ready(recon_head(x_b, w1, b1, w2, b2))
    y_b_ref = recon_head_reference(x_b, w1, b1, w2, b2)
    assert y_b.shape == (3, 5, 4, patch_length), y_b.shape
    err_b = float(jnp.max(jnp.abs(y_b - y_b_ref)))
    assert err_b < 1e-4, err_b

    print("KERNEL_OK")
</pallas_src>

<mosaic_0001>
module attributes {stable_mosaic.version = 11 : i64} {
  func.func @_recon_head_kernel(%arg0: i32, %arg1: memref<8x512xf32, #tpu.memory_space<vmem>>, %arg2: memref<512x512xf32, #tpu.memory_space<vmem>>, %arg3: memref<1x512xf32, #tpu.memory_space<vmem>>, %arg4: memref<512x128xf32, #tpu.memory_space<vmem>>, %arg5: memref<1x128xf32, #tpu.memory_space<vmem>>, %arg6: memref<8x128xf32, #tpu.memory_space<vmem>>) attributes {dimension_semantics = [#tpu.dimension_semantics<parallel>], iteration_bounds = array<i64: 1>, scalar_prefetch = 0 : i64, scratch_operands = 0 : i64, tpu.core_type = #tpu.core_type<tc>, window_params = [{transform_indices = @transform_0, window_bounds = array<i64: 8, 512>}, {pipeline_mode = #tpu.pipeline_mode<synchronous>, transform_indices = @transform_1, window_bounds = array<i64: 512, 512>}, {pipeline_mode = #tpu.pipeline_mode<synchronous>, transform_indices = @transform_2, window_bounds = array<i64: 1, 512>}, {pipeline_mode = #tpu.pipeline_mode<synchronous>, transform_indices = @transform_3, window_bounds = array<i64: 512, 128>}, {pipeline_mode = #tpu.pipeline_mode<synchronous>, transform_indices = @transform_4, window_bounds = array<i64: 1, 128>}, {transform_indices = @transform_5, window_bounds = array<i64: 8, 128>}]} {
    %c0 = arith.constant 0 : index
    %c0_0 = arith.constant 0 : index
    %0 = vector.load %arg1[%c0, %c0_0] : memref<8x512xf32, #tpu.memory_space<vmem>>, vector<8x512xf32>
    %c0_1 = arith.constant 0 : index
    %c0_2 = arith.constant 0 : index
    %1 = vector.load %arg2[%c0_1, %c0_2] : memref<512x512xf32, #tpu.memory_space<vmem>>, vector<512x512xf32>
    %cst = arith.constant dense<0.000000e+00> : vector<8x512xf32>
    %2 = tpu.matmul %0, %1, %cst {dimension_numbers = #tpu.dot_dimension_numbers<[1], [0], [0], [1], [0, 0, 1, 1], [], []>} : vector<8x512xf32>, vector<512x512xf32>, vector<8x512xf32> -> vector<8x512xf32>
    %c0_3 = arith.constant 0 : index
    %c0_4 = arith.constant 0 : index
    %3 = vector.load %arg3[%c0_3, %c0_4] : memref<1x512xf32, #tpu.memory_space<vmem>>, vector<1x512xf32>
    %4 = vector.broadcast %3 : vector<1x512xf32> to vector<8x512xf32>
    %5 = arith.addf %2, %4 : vector<8x512xf32>
    %cst_5 = arith.constant 0.000000e+00 : f32
    %6 = vector.broadcast %cst_5 : f32 to vector<8x512xf32>
    %7 = arith.cmpf ogt, %5, %6 : vector<8x512xf32>
    %cst_6 = arith.constant 0.000000e+00 : f32
    %8 = vector.broadcast %cst_6 : f32 to vector<8x512xf32>
    %9 = arith.minimumf %5, %8 : vector<8x512xf32>
    %10 = math.exp %9 : vector<8x512xf32>
    %cst_7 = arith.constant 1.000000e+00 : f32
    %11 = vector.broadcast %cst_7 : f32 to vector<8x512xf32>
    %12 = arith.subf %10, %11 : vector<8x512xf32>
    %13 = arith.select %7, %5, %12 : vector<8x512xi1>, vector<8x512xf32>
    %c0_8 = arith.constant 0 : index
    %c0_9 = arith.constant 0 : index
    %14 = vector.load %arg4[%c0_8, %c0_9] : memref<512x128xf32, #tpu.memory_space<vmem>>, vector<512x128xf32>
    %cst_10 = arith.constant dense<0.000000e+00> : vector<8x128xf32>
    %15 = tpu.matmul %13, %14, %cst_10 {dimension_numbers = #tpu.dot_dimension_numbers<[1], [0], [0], [1], [0, 0, 1, 1], [], []>} : vector<8x512xf32>, vector<512x128xf32>, vector<8x128xf32> -> vector<8x128xf32>
    %c0_11 = arith.constant 0 : index
    %c0_12 = arith.constant 0 : index
    %16 = vector.load %arg5[%c0_11, %c0_12] : memref<1x128xf32, #tpu.memory_space<vmem>>, vector<1x128xf32>
    %17 = vector.broadcast %16 : vector<1x128xf32> to vector<8x128xf32>
    %18 = arith.addf %15, %17 : vector<8x128xf32>
    %c0_13 = arith.constant 0 : index
    %c0_14 = arith.constant 0 : index
    %19 = vector.load %arg6[%c0_13, %c0_14] : memref<8x128xf32, #tpu.memory_space<vmem>>, vector<8x128xf32>
    tpu.vector_store %arg6[%c0_13, %c0_14], %18 {strides = array<i32>} : memref<8x128xf32, #tpu.memory_space<vmem>>, vector<8x128xf32>,
    return
  }
  func.func @transform_0(%arg0: i32) -> (i32, i32) {
    %c0_i32 = arith.constant 0 : i32
    %c0_i32_0 = arith.constant 0 : i32
    return %arg0, %c0_i32 : i32, i32
  }
  func.func @transform_1(%arg0: i32) -> (i32, i32) {
    %c0_i32 = arith.constant 0 : i32
    %c0_i32_0 = arith.constant 0 : i32
    %c0_i32_1 = arith.constant 0 : i32
    return %c0_i32, %c0_i32_0 : i32, i32
  }
  func.func @transform_2(%arg0: i32) -> (i32, i32) {
    %c0_i32 = arith.constant 0 : i32
    %c0_i32_0 = arith.constant 0 : i32
    %c0_i32_1 = arith.constant 0 : i32
    return %c0_i32, %c0_i32_0 : i32, i32
  }
  func.func @transform_3(%arg0: i32) -> (i32, i32) {
    %c0_i32 = arith.constant 0 : i32
    %c0_i32_0 = arith.constant 0 : i32
    %c0_i32_1 = arith.constant 0 : i32
    return %c0_i32, %c0_i32_0 : i32, i32
  }
  func.func @transform_4(%arg0: i32) -> (i32, i32) {
    %c0_i32 = arith.constant 0 : i32
    %c0_i32_0 = arith.constant 0 : i32
    %c0_i32_1 = arith.constant 0 : i32
    return %c0_i32, %c0_i32_0 : i32, i32
  }
  func.func @transform_5(%arg0: i32) -> (i32, i32) {
    %c0_i32 = arith.constant 0 : i32
    %c0_i32_0 = arith.constant 0 : i32
    return %arg0, %c0_i32 : i32, i32
  }
}

</mosaic_0001>

<llo_original>
// kernel: tpu_custom_call.1
$region0: #{tpu_custom_call.1}
  #allocation0 [shape = 'u32[]', space=smem, size = 0x4, offset = 0x4, fixed_abs, tag = 'smem constant byte address 0x4 - core index']
  #allocation1 [shape = 'u32[144,128]{1,0:T(1,128)}', space=vmem, size = 0x12000, scoped, tag = 'internal scratch']
  %s0 = inlined_call_operand.hbm [shape: f32[8,512], index: 0, kind: input, shape index: {}]
  %s1 = inlined_call_operand.hbm [shape: f32[512,512], index: 1, kind: input, shape index: {}]
  %s2 = inlined_call_operand.vmem [shape: f32[1,512], index: 2, kind: input, shape index: {}]
  %s3 = inlined_call_operand.hbm [shape: f32[512,128], index: 3, kind: input, shape index: {}]
  %s4 = inlined_call_operand.vmem [shape: f32[1,128], index: 4, kind: input, shape index: {}]
  %s5 = inlined_call_operand.hbm [shape: f32[8,128], index: 5, kind: output, shape index: {}]
  %s6 = sld [smem:[#allocation0]]
  $region42: #{tpu_custom_call.1} parent=0
    _
  %s8 = ssub.s32 1, %s6
  %s9 = scalar_select 0, %s8, %s6
  $region1: #{tpu_custom_call.1} parent=0
    #allocation2 [shape = 'u8[16384]{0}', space=vmem, size = 0x4000, scoped, tag = 'input window, operand 0, single buffered']
    #allocation3 [shape = 's32[1]{0}', space=sflag, size = 0x4, scoped, tag = 'scoped memory for tpu_custom_call.1']
    #allocation4 [shape = 's32[1]{0}', space=sflag, size = 0x4, scoped, tag = 'scoped memory for tpu_custom_call.1']
    #allocation5 [shape = 'u8[1048576]{0}', space=vmem, size = 0x100000, scoped, tag = 'input window, operand 1, single buffered']
    #allocation6 [shape = 's32[1]{0}', space=sflag, size = 0x4, scoped, tag = 'scoped memory for tpu_custom_call.1']
    #allocation7 [shape = 'u8[262144]{0}', space=vmem, size = 0x40000, scoped, tag = 'input window, operand 3, single buffered']
    #allocation8 [shape = 'u8[4096]{0}', space=vmem, size = 0x1000, scoped, tag = 'output window, operand 0, single buffered']
    %10 = vsyncpa [#allocation3], 0
    %11 = vsyncpa [#allocation6], 0
    %12 = vsyncpa [#allocation4], 0
    // Predicated region
    $region2: #{tpu_custom_call.1} parent=1 // pred_check
      _
    $region3: #{tpu_custom_call.1} parent=1 // pred_check_branch
      %14 = sbr.rel (0) target = $region5
    $region4: #{tpu_custom_call.1} parent=1 // pred_region
      %s16 = ssub.s32 512, 512
      %17 = vsyncadd [#allocation3], %s16
      %s19 = sshll.u32 [#allocation2], 4
      %s20 = int_to_ptr.vmem [resolvable:$true] %s19
      %22 = dma.hbm_to_vmem [thread:$0]  %s0, 512, %s20, [#allocation3]
    $region5: #{tpu_custom_call.1} parent=1 // pred_fallthru
      _
    // Predicated region
    $region6: #{tpu_custom_call.1} parent=1 // pred_check
      _
    $region7: #{tpu_custom_call.1} parent=1 // pred_check_branch
      %24 = sbr.rel (0) target = $region9
    $region8: #{tpu_custom_call.1} parent=1 // pred_region
      %s26 = ssub.s32 32768, 32768
      %27 = vsyncadd [#allocation6], %s26
      %s28 = sshll.u32 [#allocation5], 4
      %s29 = int_to_ptr.vmem [resolvable:$true] %s28
      %34 = dma.hbm_to_vmem [thread:$0]  %s1, 32768, %s29, [#allocation6], 512, 512, 32
    $region9: #{tpu_custom_call.1} parent=1 // pred_fallthru
      _
    // Predicated region
    $region10: #{tpu_custom_call.1} parent=1 // pred_check
      _
    $region11: #{tpu_custom_call.1} parent=1 // pred_check_branch
      %36 = sbr.rel (0) target = $region13
    $region12: #{tpu_custom_call.1} parent=1 // pred_region
      _
    $region13: #{tpu_custom_call.1} parent=1 // pred_fallthru
      _
    // Predicated region
    $region14: #{tpu_custom_call.1} parent=1 // pred_check
      _
    $region15: #{tpu_custom_call.1} parent=1 // pred_check_branch
      %38 = sbr.rel (0) target = $region17
    $region16: #{tpu_custom_call.1} parent=1 // pred_region
      %s40 = ssub.s32 8192, 8192
      %41 = vsyncadd [#allocation6], %s40
      %s42 = sshll.u32 [#allocation7], 4
      %s43 = int_to_ptr.vmem [resolvable:$true] %s42
      %48 = dma.hbm_to_vmem [thread:$0]  %s3, 8192, %s43, [#allocation6], 128, 128, 8
    $region17: #{tpu_custom_call.1} parent=1 // pred_fallthru
      _
    // Predicated region
    $region18: #{tpu_custom_call.1} parent=1 // pred_check
      _
    $region19: #{tpu_custom_call.1} parent=1 // pred_check_branch
      %50 = sbr.rel (0) target = $region21
    $region20: #{tpu_custom_call.1} parent=1 // pred_region
      _
    $region21: #{tpu_custom_call.1} parent=1 // pred_fallthru
      _
    // Predicated region
    $region22: #{tpu_custom_call.1} parent=1 // pred_check
      _
    $region23: #{tpu_custom_call.1} parent=1 // pred_check_branch
      %52 = sbr.rel (0) target = $region25
    $region24: #{tpu_custom_call.1} parent=1 // pred_region
      %53 = dma.done [#allocation3], 512
    $region25: #{tpu_custom_call.1} parent=1 // pred_fallthru
      _
    // Predicated region
    $region26: #{tpu_custom_call.1} parent=1 // pred_check
      _
    $region27: #{tpu_custom_call.1} parent=1 // pred_check_branch
      %55 = sbr.rel (0) target = $region29
    $region28: #{tpu_custom_call.1} parent=1 // pred_region
      %56 = dma.done [#allocation6], 32768
    $region29: #{tpu_custom_call.1} parent=1 // pred_fallthru
      _
    // Predicated region
    $region30: #{tpu_custom_call.1} parent=1 // pred_check
      _
    $region31: #{tpu_custom_call.1} parent=1 // pred_check_branch
      %58 = sbr.rel (0) target = $region33
    $region32: #{tpu_custom_call.1} parent=1 // pred_region
      %59 = dma.done [#allocation6], 8192
    $region33: #{tpu_custom_call.1} parent=1 // pred_fallthru
      _
    %v60 = vld [vmem:[#allocation2] sm:$0xff]
    %v61 = vld [vmem:[#allocation2 + $0x8] sm:$0xff]
    %v62 = vld [vmem:[#allocation2 + $0x10] sm:$0xff]
    %v63 = vld [vmem:[#allocation2 + $0x18] sm:$0xff]
    %v64 = vld [vmem:[#allocation5] sm:$0xff]
    %v65 = vld [vmem:[#allocation5 + $0x8] sm:$0xff]
    %v66 = vld [vmem:[#allocation5 + $0x10] sm:$0xff]
    %v67 = vld [vmem:[#allocation5 + $0x18] sm:$0xff]
    %v68 = vld [vmem:[#allocation5 + $0x20] sm:$0xff]
    %v69 = vld [vmem:[#allocation5 + $0x28] sm:$0xff]
    %v70 = vld [vmem:[#allocation5 + $0x30] sm:$0xff]
    %v71 = vld [vmem:[#allocation5 + $0x38] sm:$0xff]
    %v72 = vld [vmem:[#allocation5 + $0x40] sm:$0xff]
    %v73 = vld [vmem:[#allocation5 + $0x48] sm:$0xff]
    %v74 = vld [vmem:[#allocation5 + $0x50] sm:$0xff]
    %v75 = vld [vmem:[#allocation5 + $0x58] sm:$0xff]
    %v76 = vld [vmem:[#allocation5 + $0x60] sm:$0xff]
    %v77 = vld [vmem:[#allocation5 + $0x68] sm:$0xff]
    %v78 = vld [vmem:[#allocation5 + $0x70] sm:$0xff]
    %v79 = vld [vmem:[#allocation5 + $0x78] sm:$0xff]
    %v80 = vld [vmem:[#allocation5 + $0x80] sm:$0xff]
    %v81 = vld [vmem:[#allocation5 + $0x88] sm:$0xff]
    %v82 = vld [vmem:[#allocation5 + $0x90] sm:$0xff]
    %v83 = vld [vmem:[#allocation5 + $0x98] sm:$0xff]
    %v84 = vld [vmem:[#allocation5 + $0xa0] sm:$0xff]
    %v85 = vld [vmem:[#allocation5 + $0xa8] sm:$0xff]
    %v86 = vld [vmem:[#allocation5 + $0xb0] sm:$0xff]
    %v87 = vld [vmem:[#allocation5 + $0xb8] sm:$0xff]
    %v88 = vld [vmem:[#allocation5 + $0xc0] sm:$0xff]
    %v89 = vld [vmem:[#allocation5 + $0xc8] sm:$0xff]
    %v90 = vld [vmem:[#allocation5 + $0xd0] sm:$0xff]
    %v91 = vld [vmem:[#allocation5 + $0xd8] sm:$0xff]
    %v92 = vld [vmem:[#allocation5 + $0xe0] sm:$0xff]
    %v93 = vld [vmem:[#allocation5 + $0xe8] sm:$0xff]
    %v94 = vld [vmem:[#allocation5 + $0xf0] sm:$0xff]
    %v95 = vld [vmem:[#allocation5 + $0xf8] sm:$0xff]
    %v96 = vld [vmem:[#allocation5 + $0x100] sm:$0xff]
    %v97 = vld [vmem:[#allocation5 + $0x108] sm:$0xff]
    %v98 = vld [vmem:[#allocation5 + $0x110] sm:$0xff]
    %v99 = vld [vmem:[#allocation5 + $0x118] sm:$0xff]
    %v100 = vld [vmem:[#allocation5 + $0x120] sm:$0xff]
    %v101 = vld [vmem:[#allocation5 + $0x128] sm:$0xff]
    %v102 = vld [vmem:[#allocation5 + $0x130] sm:$0xff]
    %v103 = vld [vmem:[#allocation5 + $0x138] sm:$0xff]
    %v104 = vld [vmem:[#allocation5 + $0x140] sm:$0xff]
    %v105 = vld [vmem:[#allocation5 + $0x148] sm:$0xff]
    %v106 = vld [vmem:[#allocation5 + $0x150] sm:$0xff]
    %v107 = vld [vmem:[#allocation5 + $0x158] sm:$0xff]
    %v108 = vld [vmem:[#allocation5 + $0x160] sm:$0xff]
    %v109 = vld [vmem:[#allocation5 + $0x168] sm:$0xff]
    %v110 = vld [vmem:[#allocation5 + $0x170] sm:$0xff]
    %v111 = vld [vmem:[#allocation5 + $0x178] sm:$0xff]
    %v112 = vld [vmem:[#allocation5 + $0x180] sm:$0xff]
    %v113 = vld [vmem:[#allocation5 + $0x188] sm:$0xff]
    %v114 = vld [vmem:[#allocation5 + $0x190] sm:$0xff]
    %v115 = vld [vmem:[#allocation5 + $0x198] sm:$0xff]
    %v116 = vld [vmem:[#allocation5 + $0x1a0] sm:$0xff]
    %v117 = vld [vmem:[#allocation5 + $0x1a8] sm:$0xff]
    %v118 = vld [vmem:[#allocation5 + $0x1b0] sm:$0xff]
    %v119 = vld [vmem:[#allocation5 + $0x1b8] sm:$0xff]
    %v120 = vld [vmem:[#allocation5 + $0x1c0] sm:$0xff]
    %v121 = vld [vmem:[#allocation5 + $0x1c8] sm:$0xff]
    %v122 = vld [vmem:[#allocation5 + $0x1d0] sm:$0xff]
    %v123 = vld [vmem:[#allocation5 + $0x1d8] sm:$0xff]
    %v124 = vld [vmem:[#allocation5 + $0x1e0] sm:$0xff]
    %v125 = vld [vmem:[#allocation5 + $0x1e8] sm:$0xff]
    %v126 = vld [vmem:[#allocation5 + $0x1f0] sm:$0xff]
    %v127 = vld [vmem:[#allocation5 + $0x1f8] sm:$0xff]
    %v128 = vld [vmem:[#allocation5 + $0x200] sm:$0xff]
    %v129 = vld [vmem:[#allocation5 + $0x208] sm:$0xff]
    %v130 = vld [vmem:[#allocation5 + $0x210] sm:$0xff]
    %v131 = vld [vmem:[#allocation5 + $0x218] sm:$0xff]
    %v132 = vld [vmem:[#allocation5 + $0x220] sm:$0xff]
    %v133 = vld [vmem:[#allocation5 + $0x228] sm:$0xff]
    %v134 = vld [vmem:[#allocation5 + $0x230] sm:$0xff]
    %v135 = vld [vmem:[#allocation5 + $0x238] sm:$0xff]
    %v136 = vld [vmem:[#allocation5 + $0x240] sm:$0xff]
    %v137 = vld [vmem:[#allocation5 + $0x248] sm:$0xff]
    %v138 = vld [vmem:[#allocation5 + $0x250] sm:$0xff]
    %v139 = vld [vmem:[#allocation5 + $0x258] sm:$0xff]
    %v140 = vld [vmem:[#allocation5 + $0x260] sm:$0xff]
    %v141 = vld [vmem:[#allocation5 + $0x268] sm:$0xff]
    %v142 = vld [vmem:[#allocation5 + $0x270] sm:$0xff]
    %v143 = vld [vmem:[#allocation5 + $0x278] sm:$0xff]
    %v144 = vld [vmem:[#allocation5 + $0x280] sm:$0xff]
    %v145 = vld [vmem:[#allocation5 + $0x288] sm:$0xff]
    %v146 = vld [vmem:[#allocation5 + $0x290] sm:$0xff]
    %v147 = vld [vmem:[#allocation5 + $0x298] sm:$0xff]
    %v148 = vld [vmem:[#allocation5 + $0x2a0] sm:$0xff]
    %v149 = vld [vmem:[#allocation5 + $0x2a8] sm:$0xff]
    %v150 = vld [vmem:[#allocation5 + $0x2b0] sm:$0xff]
    %v151 = vld [vmem:[#allocation5 + $0x2b8] sm:$0xff]
    %v152 = vld [vmem:[#allocation5 + $0x2c0] sm:$0xff]
    %v153 = vld [vmem:[#allocation5 + $0x2c8] sm:$0xff]
    %v154 = vld [vmem:[#allocation5 + $0x2d0] sm:$0xff]
    %v155 = vld [vmem:[#allocation5 + $0x2d8] sm:$0xff]
    %v156 = vld [vmem:[#allocation5 + $0x2e0] sm:$0xff]
    %v157 = vld [vmem:[#allocation5 + $0x2e8] sm:$0xff]
    %v158 = vld [vmem:[#allocation5 + $0x2f0] sm:$0xff]
    %v159 = vld [vmem:[#allocation5 + $0x2f8] sm:$0xff]
    %v160 = vld [vmem:[#allocation5 + $0x300] sm:$0xff]
    %v161 = vld [vmem:[#allocation5 + $0x308] sm:$0xff]
    %v162 = vld [vmem:[#allocation5 + $0x310] sm:$0xff]
    %v163 = vld [vmem:[#allocation5 + $0x318] sm:$0xff]
    %v164 = vld [vmem:[#allocation5 + $0x320] sm:$0xff]
    %v165 = vld [vmem:[#allocation5 + $0x328] sm:$0xff]
    %v166 = vld [vmem:[#allocation5 + $0x330] sm:$0xff]
    %v167 = vld [vmem:[#allocation5 + $0x338] sm:$0xff]
    %v168 = vld [vmem:[#allocation5 + $0x340] sm:$0xff]
    %v169 = vld [vmem:[#allocation5 + $0x348] sm:$0xff]
    %v170 = vld [vmem:[#allocation5 + $0x350] sm:$0xff]
    %v171 = vld [vmem:[#allocation5 + $0x358] sm:$0xff]
    %v172 = vld [vmem:[#allocation5 + $0x360] sm:$0xff]
    %v173 = vld [vmem:[#allocation5 + $0x368] sm:$0xff]
    %v174 = vld [vmem:[#allocation5 + $0x370] sm:$0xff]
    %v175 = vld [vmem:[#allocation5 + $0x378] sm:$0xff]
    %v176 = vld [vmem:[#allocation5 + $0x380] sm:$0xff]
    %v177 = vld [vmem:[#allocation5 + $0x388] sm:$0xff]
    %v178 = vld [vmem:[#allocation5 + $0x390] sm:$0xff]
    %v179 = vld [vmem:[#allocation5 + $0x398] sm:$0xff]
    %v180 = vld [vmem:[#allocation5 + $0x3a0] sm:$0xff]
    %v181 = vld [vmem:[#allocation5 + $0x3a8] sm:$0xff]
    %v182 = vld [vmem:[#allocation5 + $0x3b0] sm:$0xff]
    %v183 = vld [vmem:[#allocation5 + $0x3b8] sm:$0xff]
    %v184 = vld [vmem:[#allocation5 + $0x3c0] sm:$0xff]
    %v185 = vld [vmem:[#allocation5 + $0x3c8] sm:$0xff]
    %v186 = vld [vmem:[#allocation5 + $0x3d0] sm:$0xff]
    %v187 = vld [vmem:[#allocation5 + $0x3d8] sm:$0xff]
    %v188 = vld [vmem:[#allocation5 + $0x3e0] sm:$0xff]
    %v189 = vld [vmem:[#allocation5 + $0x3e8] sm:$0xff]
    %v190 = vld [vmem:[#allocation5 + $0x3f0] sm:$0xff]
    %v191 = vld [vmem:[#allocation5 + $0x3f8] sm:$0xff]
    %v192 = vld [vmem:[#allocation5 + $0x400] sm:$0xff]
    %v193 = vld [vmem:[#allocation5 + $0x408] sm:$0xff]
    %v194 = vld [vmem:[#allocation5 + $0x410] sm:$0xff]
    %v195 = vld [vmem:[#allocation5 + $0x418] sm:$0xff]
    %v196 = vld [vmem:[#allocation5 + $0x420] sm:$0xff]
    %v197 = vld [vmem:[#allocation5 + $0x428] sm:$0xff]
    %v198 = vld [vmem:[#allocation5 + $0x430] sm:$0xff]
    %v199 = vld [vmem:[#allocation5 + $0x438] sm:$0xff]
    %v200 = vld [vmem:[#allocation5 + $0x440] sm:$0xff]
    %v201 = vld [vmem:[#allocation5 + $0x448] sm:$0xff]
    %v202 = vld [vmem:[#allocation5 + $0x450] sm:$0xff]
    %v203 = vld [vmem:[#allocation5 + $0x458] sm:$0xff]
    %v204 = vld [vmem:[#allocation5 + $0x460] sm:$0xff]
    %v205 = vld [vmem:[#allocation5 + $0x468] sm:$0xff]
    %v206 = vld [vmem:[#allocation5 + $0x470] sm:$0xff]
    %v207 = vld [vmem:[#allocation5 + $0x478] sm:$0xff]
    %v208 = vld [vmem:[#allocation5 + $0x480] sm:$0xff]
    %v209 = vld [vmem:[#allocation5 + $0x488] sm:$0xff]
    %v210 = vld [vmem:[#allocation5 + $0x490] sm:$0xff]
    %v211 = vld [vmem:[#allocation5 + $0x498] sm:$0xff]
    %v212 = vld [vmem:[#allocation5 + $0x4a0] sm:$0xff]
    %v213 = vld [vmem:[#allocation5 + $0x4a8] sm:$0xff]
    %v214 = vld [vmem:[#allocation5 + $0x4b0] sm:$0xff]
    %v215 = vld [vmem:[#allocation5 + $0x4b8] sm:$0xff]
    %v216 = vld [vmem:[#allocation5 + $0x4c0] sm:$0xff]
    %v217 = vld [vmem:[#allocation5 + $0x4c8] sm:$0xff]
    %v218 = vld [vmem:[#allocation5 + $0x4d0] sm:$0xff]
    %v219 = vld [vmem:[#allocation5 + $0x4d8] sm:$0xff]
    %v220 = vld [vmem:[#allocation5 + $0x4e0] sm:$0xff]
    %v221 = vld [vmem:[#allocation5 + $0x4e8] sm:$0xff]
    %v222 = vld [vmem:[#allocation5 + $0x4f0] sm:$0xff]
    %v223 = vld [vmem:[#allocation5 + $0x4f8] sm:$0xff]
    %v224 = vld [vmem:[#allocation5 + $0x500] sm:$0xff]
    %v225 = vld [vmem:[#allocation5 + $0x508] sm:$0xff]
    %v226 = vld [vmem:[#allocation5 + $0x510] sm:$0xff]
    %v227 = vld [vmem:[#allocation5 + $0x518] sm:$0xff]
    %v228 = vld [vmem:[#allocation5 + $0x520] sm:$0xff]
    %v229 = vld [vmem:[#allocation5 + $0x528] sm:$0xff]
    %v230 = vld [vmem:[#allocation5 + $0x530] sm:$0xff]
    %v231 = vld [vmem:[#allocation5 + $0x538] sm:$0xff]
    %v232 = vld [vmem:[#allocation5 + $0x540] sm:$0xff]
    %v233 = vld [vmem:[#allocation5 + $0x548] sm:$0xff]
    %v234 = vld [vmem:[#allocation5 + $0x550] sm:$0xff]
    %v235 = vld [vmem:[#allocation5 + $0x558] sm:$0xff]
    %v236 = vld [vmem:[#allocation5 + $0x560] sm:$0xff]
    %v237 = vld [vmem:[#allocation5 + $0x568] sm:$0xff]
    %v238 = vld [vmem:[#allocation5 + $0x570] sm:$0xff]
    %v239 = vld [vmem:[#allocation5 + $0x578] sm:$0xff]
    %v240 = vld [vmem:[#allocation5 + $0x580] sm:$0xff]
    %v241 = vld [vmem:[#allocation5 + $0x588] sm:$0xff]
    %v242 = vld [vmem:[#allocation5 + $0x590] sm:$0xff]
    %v243 = vld [vmem:[#allocation5 + $0x598] sm:$0xff]
    %v244 = vld [vmem:[#allocation5 + $0x5a0] sm:$0xff]
    %v245 = vld [vmem:[#allocation5 + $0x5a8] sm:$0xff]
    %v246 = vld [vmem:[#allocation5 + $0x5b0] sm:$0xff]
    %v247 = vld [vmem:[#allocation5 + $0x5b8] sm:$0xff]
    %v248 = vld [vmem:[#allocation5 + $0x5c0] sm:$0xff]
    %v249 = vld [vmem:[#allocation5 + $0x5c8] sm:$0xff]
    %v250 = vld [vmem:[#allocation5 + $0x5d0] sm:$0xff]
    %v251 = vld [vmem:[#allocation5 + $0x5d8] sm:$0xff]
    %v252 = vld [vmem:[#allocation5 + $0x5e0] sm:$0xff]
    %v253 = vld [vmem:[#allocation5 + $0x5e8] sm:$0xff]
    %v254 = vld [vmem:[#allocation5 + $0x5f0] sm:$0xff]
    %v255 = vld [vmem:[#allocation5 + $0x5f8] sm:$0xff]
    %v256 = vld [vmem:[#allocation5 + $0x600] sm:$0xff]
    %v257 = vld [vmem:[#allocation5 + $0x608] sm:$0xff]
    %v258 = vld [vmem:[#allocation5 + $0x610] sm:$0xff]
    %v259 = vld [vmem:[#allocation5 + $0x618] sm:$0xff]
    %v260 = vld [vmem:[#allocation5 + $0x620] sm:$0xff]
    %v261 = vld [vmem:[#allocation5 + $0x628] sm:$0xff]
    %v262 = vld [vmem:[#allocation5 + $0x630] sm:$0xff]
    %v263 = vld [vmem:[#allocation5 + $0x638] sm:$0xff]
    %v264 = vld [vmem:[#allocation5 + $0x640] sm:$0xff]
    %v265 = vld [vmem:[#allocation5 + $0x648] sm:$0xff]
    %v266 = vld [vmem:[#allocation5 + $0x650] sm:$0xff]
    %v267 = vld [vmem:[#allocation5 + $0x658] sm:$0xff]
    %v268 = vld [vmem:[#allocation5 + $0x660] sm:$0xff]
    %v269 = vld [vmem:[#allocation5 + $0x668] sm:$0xff]
    %v270 = vld [vmem:[#allocation5 + $0x670] sm:$0xff]
    %v271 = vld [vmem:[#allocation5 + $0x678] sm:$0xff]
    %v272 = vld [vmem:[#allocation5 + $0x680] sm:$0xff]
    %v273 = vld [vmem:[#allocation5 + $0x688] sm:$0xff]
    %v274 = vld [vmem:[#allocation5 + $0x690] sm:$0xff]
    %v275 = vld [vmem:[#allocation5 + $0x698] sm:$0xff]
    %v276 = vld [vmem:[#allocation5 + $0x6a0] sm:$0xff]
    %v277 = vld [vmem:[#allocation5 + $0x6a8] sm:$0xff]
    %v278 = vld [vmem:[#allocation5 + $0x6b0] sm:$0xff]
    %v279 = vld [vmem:[#allocation5 + $0x6b8] sm:$0xff]
    %v280 = vld [vmem:[#allocation5 + $0x6c0] sm:$0xff]
    %v281 = vld [vmem:[#allocation5 + $0x6c8] sm:$0xff]
    %v282 = vld [vmem:[#allocation5 + $0x6d0] sm:$0xff]
    %v283 = vld [vmem:[#allocation5 + $0x6d8] sm:$0xff]
    %v284 = vld [vmem:[#allocation5 + $0x6e0] sm:$0xff]
    %v285 = vld [vmem:[#allocation5 + $0x6e8] sm:$0xff]
    %v286 = vld [vmem:[#allocation5 + $0x6f0] sm:$0xff]
    %v287 = vld [vmem:[#allocation5 + $0x6f8] sm:$0xff]
    %v288 = vld [vmem:[#allocation5 + $0x700] sm:$0xff]
    %v289 = vld [vmem:[#allocation5 + $0x708] sm:$0xff]
    %v290 = vld [vmem:[#allocation5 + $0x710] sm:$0xff]
    %v291 = vld [vmem:[#allocation5 + $0x718] sm:$0xff]
    %v292 = vld [vmem:[#allocation5 + $0x720] sm:$0xff]
    %v293 = vld [vmem:[#allocation5 + $0x728] sm:$0xff]
    %v294 = vld [vmem:[#allocation5 + $0x730] sm:$0xff]
    %v295 = vld [vmem:[#allocation5 + $0x738] sm:$0xff]
    %v296 = vld [vmem:[#allocation5 + $0x740] sm:$0xff]
    %v297 = vld [vmem:[#allocation5 + $0x748] sm:$0xff]
    %v298 = vld [vmem:[#allocation5 + $0x750] sm:$0xff]
    %v299 = vld [vmem:[#allocation5 + $0x758] sm:$0xff]
    %v300 = vld [vmem:[#allocation5 + $0x760] sm:$0xff]
    %v301 = vld [vmem:[#allocation5 + $0x768] sm:$0xff]
    %v302 = vld [vmem:[#allocation5 + $0x770] sm:$0xff]
    %v303 = vld [vmem:[#allocation5 + $0x778] sm:$0xff]
    %v304 = vld [vmem:[#allocation5 + $0x780] sm:$0xff]
    %v305 = vld [vmem:[#allocation5 + $0x788] sm:$0xff]
    %v306 = vld [vmem:[#allocation5 + $0x790] sm:$0xff]
    %v307 = vld [vmem:[#allocation5 + $0x798] sm:$0xff]
    %v308 = vld [vmem:[#allocation5 + $0x7a0] sm:$0xff]
    %v309 = vld [vmem:[#allocation5 + $0x7a8] sm:$0xff]
    %v310 = vld [vmem:[#allocation5 + $0x7b0] sm:$0xff]
    %v311 = vld [vmem:[#allocation5 + $0x7b8] sm:$0xff]
    %v312 = vld [vmem:[#allocation5 + $0x7c0] sm:$0xff]
    %v313 = vld [vmem:[#allocation5 + $0x7c8] sm:$0xff]
    %v314 = vld [vmem:[#allocation5 + $0x7d0] sm:$0xff]
    %v315 = vld [vmem:[#allocation5 + $0x7d8] sm:$0xff]
    %v316 = vld [vmem:[#allocation5 + $0x7e0] sm:$0xff]
    %v317 = vld [vmem:[#allocation5 + $0x7e8] sm:$0xff]
    %v318 = vld [vmem:[#allocation5 + $0x7f0] sm:$0xff]
    %v319 = vld [vmem:[#allocation5 + $0x7f8] sm:$0xff]
    %v320 = vld [vmem:[%s2] sm:$0xf]
    %v322 = vlaneseq
    %v323 = vshrl.u32 %v322, 7
    %v324 = vsub.s32 0, %v323
    %v325 = vrot.slane %v320, %v324
    %v326 = vlaneseq
    %v327 = vshrl.u32 %v326, 7
    %v328 = vsub.s32 1, %v327
    %v329 = vrot.slane %v320, %v328
    %v330 = vlaneseq
    %v331 = vshrl.u32 %v330, 7
    %v332 = vsub.s32 2, %v331
    %v333 = vrot.slane %v320, %v332
    %v334 = vlaneseq
    %v335 = vshrl.u32 %v334, 7
    %v336 = vsub.s32 3, %v335
    %v337 = vrot.slane %v320, %v336
    %342 = vmatprep.subr.mxu0 %v65
    %343 = vmatpush1.msra.mxu0 %v64
    %344 = vmatprep.subr.mxu0 %v69
    %345 = vmatpush1.msra.mxu0 %v68
    %346 = vmatprep.subr.mxu0 %v73
    %347 = vmatpush1.msra.mxu0 %v72
    %348 = vmatprep.subr.mxu0 %v77
    %349 = vmatpush1.msra.mxu0 %v76
    %350 = vmatprep.subr.mxu0 %v81
    %351 = vmatpush1.msra.mxu0 %v80
    %352 = vmatprep.subr.mxu0 %v85
    %353 = vmatpush1.msra.mxu0 %v84
    %354 = vmatprep.subr.mxu0 %v89
    %355 = vmatpush1.msra.mxu0 %v88
    %356 = vmatprep.subr.mxu0 %v93
    %357 = vmatpush1.msra.mxu0 %v92
    %358 = vmatprep.subr.mxu0 %v97
    %359 = vmatpush1.msra.mxu0 %v96
    %360 = vmatprep.subr.mxu0 %v101
    %361 = vmatpush1.msra.mxu0 %v100
    %362 = vmatprep.subr.mxu0 %v105
    %363 = vmatpush1.msra.mxu0 %v104
    %364 = vmatprep.subr.mxu0 %v109
    %365 = vmatpush1.msra.mxu0 %v108
    %366 = vmatprep.subr.mxu0 %v113
    %367 = vmatpush1.msra.mxu0 %v112
    %368 = vmatprep.subr.mxu0 %v117
    %369 = vmatpush1.msra.mxu0 %v116
    %370 = vmatprep.subr.mxu0 %v121
    %371 = vmatpush1.msra.mxu0 %v120
    %372 = vmatprep.subr.mxu0 %v125
    %373 = vmatpush1.msra.mxu0 %v124
    %374 = vmatprep.subr.mxu0 %v129
    %375 = vmatpush1.msra.mxu0 %v128
    %376 = vmatprep.subr.mxu0 %v133
    %377 = vmatpush1.msra.mxu0 %v132
    %378 = vmatprep.subr.mxu0 %v137
    %379 = vmatpush1.msra.mxu0 %v136
    %380 = vmatprep.subr.mxu0 %v141
    %381 = vmatpush1.msra.mxu0 %v140
    %382 = vmatprep.subr.mxu0 %v145
    %383 = vmatpush1.msra.mxu0 %v144
    %384 = vmatprep.subr.mxu0 %v149
    %385 = vmatpush1.msra.mxu0 %v148
    %386 = vmatprep.subr.mxu0 %v153
    %387 = vmatpush1.msra.mxu0 %v152
    %388 = vmatprep.subr.mxu0 %v157
    %389 = vmatpush1.msra.mxu0 %v156
    %390 = vmatprep.subr.mxu0 %v161
    %391 = vmatpush1.msra.mxu0 %v160
    %392 = vmatprep.subr.mxu0 %v165
    %393 = vmatpush1.msra.mxu0 %v164
    %394 = vmatprep.subr.mxu0 %v169
    %395 = vmatpush1.msra.mxu0 %v168
    %396 = vmatprep.subr.mxu0 %v173
    %397 = vmatpush1.msra.mxu0 %v172
    %398 = vmatprep.subr.mxu0 %v177
    %399 = vmatpush1.msra.mxu0 %v176
    %400 = vmatprep.subr.mxu0 %v181
    %401 = vmatpush1.msra.mxu0 %v180
    %402 = vmatprep.subr.mxu0 %v185
    %403 = vmatpush1.msra.mxu0 %v184
    %404 = vmatprep.subr.mxu0 %v189
    %405 = vmatpush1.msra.mxu0 %v188
    %406 = vmatprep.mubr.f32.mxu0 %v61
    %407 = vmatmul.mubr.f32.gmra.mrb[0].mxu0 %v60
    %v408 = vpop.f32.mrb[0].mxu0
    %v409 = vadd.f32 %v325, %v408
    %v410 = vpop.f32.mrb[0].mxu0
    %v411 = vadd.f32 %v329, %v410
    %412 = vdwg.mxu0
    %413 = vmatprep.subr.mxu0 %v193
    %414 = vmatpush1.msra.mxu0 %v192
    %415 = vmatprep.subr.mxu0 %v197
    %416 = vmatpush1.msra.mxu0 %v196
    %417 = vmatprep.subr.mxu0 %v201
    %418 = vmatpush1.msra.mxu0 %v200
    %419 = vmatprep.subr.mxu0 %v205
    %420 = vmatpush1.msra.mxu0 %v204
    %421 = vmatprep.subr.mxu0 %v209
    %422 = vmatpush1.msra.mxu0 %v208
    %423 = vmatprep.subr.mxu0 %v213
    %424 = vmatpush1.msra.mxu0 %v212
    %425 = vmatprep.subr.mxu0 %v217
    %426 = vmatpush1.msra.mxu0 %v216
    %427 = vmatprep.subr.mxu0 %v221
    %428 = vmatpush1.msra.mxu0 %v220
    %429 = vmatprep.subr.mxu0 %v225
    %430 = vmatpush1.msra.mxu0 %v224
    %431 = vmatprep.subr.mxu0 %v229
    %432 = vmatpush1.msra.mxu0 %v228
    %433 = vmatprep.subr.mxu0 %v233
    %434 = vmatpush1.msra.mxu0 %v232
    %435 = vmatprep.subr.mxu0 %v237
    %436 = vmatpush1.msra.mxu0 %v236
    %437 = vmatprep.subr.mxu0 %v241
    %438 = vmatpush1.msra.mxu0 %v240
    %439 = vmatprep.subr.mxu0 %v245
    %440 = vmatpush1.msra.mxu0 %v244
    %441 = vmatprep.subr.mxu0 %v249
    %442 = vmatpush1.msra.mxu0 %v248
    %443 = vmatprep.subr.mxu0 %v253
    %444 = vmatpush1.msra.mxu0 %v252
    %445 = vmatprep.subr.mxu0 %v257
    %446 = vmatpush1.msra.mxu0 %v256
    %447 = vmatprep.subr.mxu0 %v261
    %448 = vmatpush1.msra.mxu0 %v260
    %449 = vmatprep.subr.mxu0 %v265
    %450 = vmatpush1.msra.mxu0 %v264
    %451 = vmatprep.subr.mxu0 %v269
    %452 = vmatpush1.msra.mxu0 %v268
    %453 = vmatprep.subr.mxu0 %v273
    %454 = vmatpush1.msra.mxu0 %v272
    %455 = vmatprep.subr.mxu0 %v277
    %456 = vmatpush1.msra.mxu0 %v276
    %457 = vmatprep.subr.mxu0 %v281
    %458 = vmatpush1.msra.mxu0 %v280
    %459 = vmatprep.subr.mxu0 %v285
    %460 = vmatpush1.msra.mxu0 %v284
    %461 = vmatprep.subr.mxu0 %v289
    %462 = vmatpush1.msra.mxu0 %v288
    %463 = vmatprep.subr.mxu0 %v293
    %464 = vmatpush1.msra.mxu0 %v292
    %465 = vmatprep.subr.mxu0 %v297
    %466 = vmatpush1.msra.mxu0 %v296
    %467 = vmatprep.subr.mxu0 %v301
    %468 = vmatpush1.msra.mxu0 %v300
    %469 = vmatprep.subr.mxu0 %v305
    %470 = vmatpush1.msra.mxu0 %v304
    %471 = vmatprep.subr.mxu0 %v309
    %472 = vmatpush1.msra.mxu0 %v308
    %473 = vmatprep.subr.mxu0 %v313
    %474 = vmatpush1.msra.mxu0 %v312
    %475 = vmatprep.subr.mxu0 %v317
    %476 = vmatpush1.msra.mxu0 %v316
    %477 = vmatprep.mubr.f32.mxu0 %v63
    %478 = vmatmul.mubr.f32.gmra.mrb[0].mxu0 %v62
    %v479 = vpop.f32.mrb[0].mxu0
    %v480 = vadd.f32 %v409, %v479
    %v481 = vpop.f32.mrb[0].mxu0
    %v482 = vadd.f32 %v411, %v481
    %483 = vdwg.mxu0
    %484 = vmatprep.subr.mxu0 %v67
    %485 = vmatpush1.msra.mxu0 %v66
    %486 = vmatprep.subr.mxu0 %v71
    %487 = vmatpush1.msra.mxu0 %v70
    %488 = vmatprep.subr.mxu0 %v75
    %489 = vmatpush1.msra.mxu0 %v74
    %490 = vmatprep.subr.mxu0 %v79
    %491 = vmatpush1.msra.mxu0 %v78
    %492 = vmatprep.subr.mxu0 %v83
    %493 = vmatpush1.msra.mxu0 %v82
    %494 = vmatprep.subr.mxu0 %v87
    %495 = vmatpush1.msra.mxu0 %v86
    %496 = vmatprep.subr.mxu0 %v91
    %497 = vmatpush1.msra.mxu0 %v90
    %498 = vmatprep.subr.mxu0 %v95
    %499 = vmatpush1.msra.mxu0 %v94
    %500 = vmatprep.subr.mxu0 %v99
    %501 = vmatpush1.msra.mxu0 %v98
    %502 = vmatprep.subr.mxu0 %v103
    %503 = vmatpush1.msra.mxu0 %v102
    %504 = vmatprep.subr.mxu0 %v107
    %505 = vmatpush1.msra.mxu0 %v106
    %506 = vmatprep.subr.mxu0 %v111
    %507 = vmatpush1.msra.mxu0 %v110
    %508 = vmatprep.subr.mxu0 %v115
    %509 = vmatpush1.msra.mxu0 %v114
    %510 = vmatprep.subr.mxu0 %v119
    %511 = vmatpush1.msra.mxu0 %v118
    %512 = vmatprep.subr.mxu0 %v123
    %513 = vmatpush1.msra.mxu0 %v122
    %514 = vmatprep.subr.mxu0 %v127
    %515 = vmatpush1.msra.mxu0 %v126
    %516 = vmatprep.subr.mxu0 %v131
    %517 = vmatpush1.msra.mxu0 %v130
    %518 = vmatprep.subr.mxu0 %v135
    %519 = vmatpush1.msra.mxu0 %v134
    %520 = vmatprep.subr.mxu0 %v139
    %521 = vmatpush1.msra.mxu0 %v138
    %522 = vmatprep.subr.mxu0 %v143
    %523 = vmatpush1.msra.mxu0 %v142
    %524 = vmatprep.subr.mxu0 %v147
    %525 = vmatpush1.msra.mxu0 %v146
    %526 = vmatprep.subr.mxu0 %v151
    %527 = vmatpush1.msra.mxu0 %v150
    %528 = vmatprep.subr.mxu0 %v155
    %529 = vmatpush1.msra.mxu0 %v154
    %530 = vmatprep.subr.mxu0 %v159
    %531 = vmatpush1.msra.mxu0 %v158
    %532 = vmatprep.subr.mxu0 %v163
    %533 = vmatpush1.msra.mxu0 %v162
    %534 = vmatprep.subr.mxu0 %v167
    %535 = vmatpush1.msra.mxu0 %v166
    %536 = vmatprep.subr.mxu0 %v171
    %537 = vmatpush1.msra.mxu0 %v170
    %538 = vmatprep.subr.mxu0 %v175
    %539 = vmatpush1.msra.mxu0 %v174
    %540 = vmatprep.subr.mxu0 %v179
    %541 = vmatpush1.msra.mxu0 %v178
    %542 = vmatprep.subr.mxu0 %v183
    %543 = vmatpush1.msra.mxu0 %v182
    %544 = vmatprep.subr.mxu0 %v187
    %545 = vmatpush1.msra.mxu0 %v186
    %546 = vmatprep.subr.mxu0 %v191
    %547 = vmatpush1.msra.mxu0 %v190
    %548 = vmatprep.mubr.f32.mxu0 %v61
    %549 = vmatmul.mubr.f32.gmra.mrb[0].mxu0 %v60
    %v550 = vpop.f32.mrb[0].mxu0
    %v551 = vadd.f32 %v333, %v550
    %v552 = vpop.f32.mrb[0].mxu0
    %v553 = vadd.f32 %v337, %v552
    %554 = vdwg.mxu0
    %555 = vmatprep.subr.mxu0 %v195
    %556 = vmatpush1.msra.mxu0 %v194
    %557 = vmatprep.subr.mxu0 %v199
    %558 = vmatpush1.msra.mxu0 %v198
    %559 = vmatprep.subr.mxu0 %v203
    %560 = vmatpush1.msra.mxu0 %v202
    %561 = vmatprep.subr.mxu0 %v207
    %562 = vmatpush1.msra.mxu0 %v206
    %563 = vmatprep.subr.mxu0 %v211
    %564 = vmatpush1.msra.mxu0 %v210
    %565 = vmatprep.subr.mxu0 %v215
    %566 = vmatpush1.msra.mxu0 %v214
    %567 = vmatprep.subr.mxu0 %v219
    %568 = vmatpush1.msra.mxu0 %v218
    %569 = vmatprep.subr.mxu0 %v223
    %570 = vmatpush1.msra.mxu0 %v222
    %571 = vmatprep.subr.mxu0 %v227
    %572 = vmatpush1.msra.mxu0 %v226
    %573 = vmatprep.subr.mxu0 %v231
    %574 = vmatpush1.msra.mxu0 %v230
    %575 = vmatprep.subr.mxu0 %v235
    %576 = vmatpush1.msra.mxu0 %v234
    %577 = vmatprep.subr.mxu0 %v239
    %578 = vmatpush1.msra.mxu0 %v238
    %579 = vmatprep.subr.mxu0 %v243
    %580 = vmatpush1.msra.mxu0 %v242
    %581 = vmatprep.subr.mxu0 %v247
    %582 = vmatpush1.msra.mxu0 %v246
    %583 = vmatprep.subr.mxu0 %v251
    %584 = vmatpush1.msra.mxu0 %v250
    %585 = vmatprep.subr.mxu0 %v255
    %586 = vmatpush1.msra.mxu0 %v254
    %587 = vmatprep.subr.mxu0 %v259
    %588 = vmatpush1.msra.mxu0 %v258
    %589 = vmatprep.subr.mxu0 %v263
    %590 = vmatpush1.msra.mxu0 %v262
    %591 = vmatprep.subr.mxu0 %v267
    %592 = vmatpush1.msra.mxu0 %v266
    %593 = vmatprep.subr.mxu0 %v271
    %594 = vmatpush1.msra.mxu0 %v270
    %595 = vmatprep.subr.mxu0 %v275
    %596 = vmatpush1.msra.mxu0 %v274
    %597 = vmatprep.subr.mxu0 %v279
    %598 = vmatpush1.msra.mxu0 %v278
    %599 = vmatprep.subr.mxu0 %v283
    %600 = vmatpush1.msra.mxu0 %v282
    %601 = vmatprep.subr.mxu0 %v287
    %602 = vmatpush1.msra.mxu0 %v286
    %603 = vmatprep.subr.mxu0 %v291
    %604 = vmatpush1.msra.mxu0 %v290
    %605 = vmatprep.subr.mxu0 %v295
    %606 = vmatpush1.msra.mxu0 %v294
    %607 = vmatprep.subr.mxu0 %v299
    %608 = vmatpush1.msra.mxu0 %v298
    %609 = vmatprep.subr.mxu0 %v303
    %610 = vmatpush1.msra.mxu0 %v302
    %611 = vmatprep.subr.mxu0 %v307
    %612 = vmatpush1.msra.mxu0 %v306
    %613 = vmatprep.subr.mxu0 %v311
    %614 = vmatpush1.msra.mxu0 %v310
    %615 = vmatprep.subr.mxu0 %v315
    %616 = vmatpush1.msra.mxu0 %v314
    %617 = vmatprep.subr.mxu0 %v319
    %618 = vmatpush1.msra.mxu0 %v318
    %619 = vmatprep.mubr.f32.mxu0 %v63
    %620 = vmatmul.mubr.f32.gmra.mrb[0].mxu0 %v62
    %v621 = vpop.f32.mrb[0].mxu0
    %v622 = vadd.f32 %v551, %v621
    %v623 = vpop.f32.mrb[0].mxu0
    %v624 = vadd.f32 %v553, %v623
    %625 = vdwg.mxu0
    %vm626 = vcmp.gt.f32.partialorder %v480, 0.0
    %vm627 = vcmp.gt.f32.partialorder %v482, 0.0
    %vm628 = vcmp.gt.f32.partialorder %v622, 0.0
    %vm629 = vcmp.gt.f32.partialorder %v624, 0.0
    %v630 = vmin.f32 %v480, 0.0
    %v631 = vmin.f32 %v482, 0.0
    %v632 = vmin.f32 %v622, 0.0
    %v633 = vmin.f32 %v624, 0.0
    %v634 = vmul.f32 %v630, 1.442695
    %v635 = vpow.pop %v634
    %v636 = vmul.f32 %v631, 1.442695
    %v637 = vpow.pop %v636
    %v638 = vmul.f32 %v632, 1.442695
    %v639 = vpow.pop %v638
    %v640 = vmul.f32 %v633, 1.442695
    %v641 = vpow.pop %v640
    %v642 = vsub.f32 %v635, 1.0
    %v643 = vsub.f32 %v637, 1.0
    %v644 = vsub.f32 %v639, 1.0
    %v645 = vsub.f32 %v641, 1.0
    %v646 = vsel %vm626, %v480, %v642
    %v647 = vsel %vm627, %v482, %v643
    %v648 = vsel %vm628, %v622, %v644
    %v649 = vsel %vm629, %v624, %v645
    %v650 = vld [vmem:[#allocation7] sm:$0xff]
    %v651 = vld [vmem:[#allocation7 + $0x8] sm:$0xff]
    %v652 = vld [vmem:[#allocation7 + $0x10] sm:$0xff]
    %v653 = vld [vmem:[#allocation7 + $0x18] sm:$0xff]
    %v654 = vld [vmem:[#allocation7 + $0x20] sm:$0xff]
    %v655 = vld [vmem:[#allocation7 + $0x28] sm:$0xff]
    %v656 = vld [vmem:[#allocation7 + $0x30] sm:$0xff]
    %v657 = vld [vmem:[#allocation7 + $0x38] sm:$0xff]
    %v658 = vld [vmem:[#allocation7 + $0x40] sm:$0xff]
    %v659 = vld [vmem:[#allocation7 + $0x48] sm:$0xff]
    %v660 = vld [vmem:[#allocation7 + $0x50] sm:$0xff]
    %v661 = vld [vmem:[#allocation7 + $0x58] sm:$0xff]
    %v662 = vld [vmem:[#allocation7 + $0x60] sm:$0xff]
    %v663 = vld [vmem:[#allocation7 + $0x68] sm:$0xff]
    %v664 = vld [vmem:[#allocation7 + $0x70] sm:$0xff]
    %v665 = vld [vmem:[#allocation7 + $0x78] sm:$0xff]
    %v666 = vld [vmem:[#allocation7 + $0x80] sm:$0xff]
    %v667 = vld [vmem:[#allocation7 + $0x88] sm:$0xff]
    %v668 = vld [vmem:[#allocation7 + $0x90] sm:$0xff]
    %v669 = vld [vmem:[#allocation7 + $0x98] sm:$0xff]
    %v670 = vld [vmem:[#allocation7 + $0xa0] sm:$0xff]
    %v671 = vld [vmem:[#allocation7 + $0xa8] sm:$0xff]
    %v672 = vld [vmem:[#allocation7 + $0xb0] sm:$0xff]
    %v673 = vld [vmem:[#allocation7 + $0xb8] sm:$0xff]
    %v674 = vld [vmem:[#allocation7 + $0xc0] sm:$0xff]
    %v675 = vld [vmem:[#allocation7 + $0xc8] sm:$0xff]
    %v676 = vld [vmem:[#allocation7 + $0xd0] sm:$0xff]
    %v677 = vld [vmem:[#allocation7 + $0xd8] sm:$0xff]
    %v678 = vld [vmem:[#allocation7 + $0xe0] sm:$0xff]
    %v679 = vld [vmem:[#allocation7 + $0xe8] sm:$0xff]
    %v680 = vld [vmem:[#allocation7 + $0xf0] sm:$0xff]
    %v681 = vld [vmem:[#allocation7 + $0xf8] sm:$0xff]
    %v682 = vld [vmem:[#allocation7 + $0x100] sm:$0xff]
    %v683 = vld [vmem:[#allocation7 + $0x108] sm:$0xff]
    %v684 = vld [vmem:[#allocation7 + $0x110] sm:$0xff]
    %v685 = vld [vmem:[#allocation7 + $0x118] sm:$0xff]
    %v686 = vld [vmem:[#allocation7 + $0x120] sm:$0xff]
    %v687 = vld [vmem:[#allocation7 + $0x128] sm:$0xff]
    %v688 = vld [vmem:[#allocation7 + $0x130] sm:$0xff]
    %v689 = vld [vmem:[#allocation7 + $0x138] sm:$0xff]
    %v690 = vld [vmem:[#allocation7 + $0x140] sm:$0xff]
    %v691 = vld [vmem:[#allocation7 + $0x148] sm:$0xff]
    %v692 = vld [vmem:[#allocation7 + $0x150] sm:$0xff]
    %v693 = vld [vmem:[#allocation7 + $0x158] sm:$0xff]
    %v694 = vld [vmem:[#allocation7 + $0x160] sm:$0xff]
    %v695 = vld [vmem:[#allocation7 + $0x168] sm:$0xff]
    %v696 = vld [vmem:[#allocation7 + $0x170] sm:$0xff]
    %v697 = vld [vmem:[#allocation7 + $0x178] sm:$0xff]
    %v698 = vld [vmem:[#allocation7 + $0x180] sm:$0xff]
    %v699 = vld [vmem:[#allocation7 + $0x188] sm:$0xff]
    %v700 = vld [vmem:[#allocation7 + $0x190] sm:$0xff]
    %v701 = vld [vmem:[#allocation7 + $0x198] sm:$0xff]
    %v702 = vld [vmem:[#allocation7 + $0x1a0] sm:$0xff]
    %v703 = vld [vmem:[#allocation7 + $0x1a8] sm:$0xff]
    %v704 = vld [vmem:[#allocation7 + $0x1b0] sm:$0xff]
    %v705 = vld [vmem:[#allocation7 + $0x1b8] sm:$0xff]
    %v706 = vld [vmem:[#allocation7 + $0x1c0] sm:$0xff]
    %v707 = vld [vmem:[#allocation7 + $0x1c8] sm:$0xff]
    %v708 = vld [vmem:[#allocation7 + $0x1d0] sm:$0xff]
    %v709 = vld [vmem:[#allocation7 + $0x1d8] sm:$0xff]
    %v710 = vld [vmem:[#allocation7 + $0x1e0] sm:$0xff]
    %v711 = vld [vmem:[#allocation7 + $0x1e8] sm:$0xff]
    %v712 = vld [vmem:[#allocation7 + $0x1f0] sm:$0xff]
    %v713 = vld [vmem:[#allocation7 + $0x1f8] sm:$0xff]
    %v714 = vld [vmem:[%s4] sm:$0x1]
    %v716 = vlaneseq
    %v717 = vshrl.u32 %v716, 7
    %v718 = vsub.s32 0, %v717
    %v719 = vrot.slane %v714, %v718
    %721 = vmatprep.subr.mxu0 0.0
    %722 = vmatpush1.msra.mxu0 %v650
    %723 = vmatprep.subr.mxu0 0.0
    %724 = vmatpush1.msra.mxu0 %v651
    %725 = vmatprep.subr.mxu0 0.0
    %726 = vmatpush1.msra.mxu0 %v652
    %727 = vmatprep.subr.mxu0 0.0
    %728 = vmatpush1.msra.mxu0 %v653
    %729 = vmatprep.subr.mxu0 0.0
    %730 = vmatpush1.msra.mxu0 %v654
    %731 = vmatprep.subr.mxu0 0.0
    %732 = vmatpush1.msra.mxu0 %v655
    %733 = vmatprep.subr.mxu0 0.0
    %734 = vmatpush1.msra.mxu0 %v656
    %735 = vmatprep.subr.mxu0 0.0
    %736 = vmatpush1.msra.mxu0 %v657
    %737 = vmatprep.subr.mxu0 0.0
    %738 = vmatpush1.msra.mxu0 %v658
    %739 = vmatprep.subr.mxu0 0.0
    %740 = vmatpush1.msra.mxu0 %v659
    %741 = vmatprep.subr.mxu0 0.0
    %742 = vmatpush1.msra.mxu0 %v660
    %743 = vmatprep.subr.mxu0 0.0
    %744 = vmatpush1.msra.mxu0 %v661
    %745 = vmatprep.subr.mxu0 0.0
    %746 = vmatpush1.msra.mxu0 %v662
    %747 = vmatprep.subr.mxu0 0.0
    %748 = vmatpush1.msra.mxu0 %v663
    %749 = vmatprep.subr.mxu0 0.0
    %750 = vmatpush1.msra.mxu0 %v664
    %751 = vmatprep.subr.mxu0 0.0
    %752 = vmatpush1.msra.mxu0 %v665
    %753 = vmatprep.subr.mxu0 0.0
    %754 = vmatpush1.msra.mxu0 %v666
    %755 = vmatprep.subr.mxu0 0.0
    %756 = vmatpush1.msra.mxu0 %v667
    %757 = vmatprep.subr.mxu0 0.0
    %758 = vmatpush1.msra.mxu0 %v668
    %759 = vmatprep.subr.mxu0 0.0
    %760 = vmatpush1.msra.mxu0 %v669
    %761 = vmatprep.subr.mxu0 0.0
    %762 = vmatpush1.msra.mxu0 %v670
    %763 = vmatprep.subr.mxu0 0.0
    %764 = vmatpush1.msra.mxu0 %v671
    %765 = vmatprep.subr.mxu0 0.0
    %766 = vmatpush1.msra.mxu0 %v672
    %767 = vmatprep.subr.mxu0 0.0
    %768 = vmatpush1.msra.mxu0 %v673
    %769 = vmatprep.subr.mxu0 0.0
    %770 = vmatpush1.msra.mxu0 %v674
    %771 = vmatprep.subr.mxu0 0.0
    %772 = vmatpush1.msra.mxu0 %v675
    %773 = vmatprep.subr.mxu0 0.0
    %774 = vmatpush1.msra.mxu0 %v676
    %775 = vmatprep.subr.mxu0 0.0
    %776 = vmatpush1.msra.mxu0 %v677
    %777 = vmatprep.subr.mxu0 0.0
    %778 = vmatpush1.msra.mxu0 %v678
    %779 = vmatprep.subr.mxu0 0.0
    %780 = vmatpush1.msra.mxu0 %v679
    %781 = vmatprep.subr.mxu0 0.0
    %782 = vmatpush1.msra.mxu0 %v680
    %783 = vmatprep.subr.mxu0 0.0
    %784 = vmatpush1.msra.mxu0 %v681
    %785 = vmatprep.mubr.f32.mxu0 %v647
    %786 = vmatmul.mubr.f32.gmra.mrb[0].mxu0 %v646
    %v787 = vpop.f32.mrb[0].mxu0
    %v788 = vadd.f32 %v719, %v787
    %v789 = vpop.f32.mrb[0].mxu0
    %790 = vdwg.mxu0
    %791 = vmatprep.subr.mxu0 0.0
    %792 = vmatpush1.msra.mxu0 %v682
    %793 = vmatprep.subr.mxu0 0.0
    %794 = vmatpush1.msra.mxu0 %v683
    %795 = vmatprep.subr.mxu0 0.0
    %796 = vmatpush1.msra.mxu0 %v684
    %797 = vmatprep.subr.mxu0 0.0
    %798 = vmatpush1.msra.mxu0 %v685
    %799 = vmatprep.subr.mxu0 0.0
    %800 = vmatpush1.msra.mxu0 %v686
    %801 = vmatprep.subr.mxu0 0.0
    %802 = vmatpush1.msra.mxu0 %v687
    %803 = vmatprep.subr.mxu0 0.0
    %804 = vmatpush1.msra.mxu0 %v688
    %805 = vmatprep.subr.mxu0 0.0
    %806 = vmatpush1.msra.mxu0 %v689
    %807 = vmatprep.subr.mxu0 0.0
    %808 = vmatpush1.msra.mxu0 %v690
    %809 = vmatprep.subr.mxu0 0.0
    %810 = vmatpush1.msra.mxu0 %v691
    %811 = vmatprep.subr.mxu0 0.0
    %812 = vmatpush1.msra.mxu0 %v692
    %813 = vmatprep.subr.mxu0 0.0
    %814 = vmatpush1.msra.mxu0 %v693
    %815 = vmatprep.subr.mxu0 0.0
    %816 = vmatpush1.msra.mxu0 %v694
    %817 = vmatprep.subr.mxu0 0.0
    %818 = vmatpush1.msra.mxu0 %v695
    %819 = vmatprep.subr.mxu0 0.0
    %820 = vmatpush1.msra.mxu0 %v696
    %821 = vmatprep.subr.mxu0 0.0
    %822 = vmatpush1.msra.mxu0 %v697
    %823 = vmatprep.subr.mxu0 0.0
    %824 = vmatpush1.msra.mxu0 %v698
    %825 = vmatprep.subr.mxu0 0.0
    %826 = vmatpush1.msra.mxu0 %v699
    %827 = vmatprep.subr.mxu0 0.0
    %828 = vmatpush1.msra.mxu0 %v700
    %829 = vmatprep.subr.mxu0 0.0
    %830 = vmatpush1.msra.mxu0 %v701
    %831 = vmatprep.subr.mxu0 0.0
    %832 = vmatpush1.msra.mxu0 %v702
    %833 = vmatprep.subr.mxu0 0.0
    %834 = vmatpush1.msra.mxu0 %v703
    %835 = vmatprep.subr.mxu0 0.0
    %836 = vmatpush1.msra.mxu0 %v704
    %837 = vmatprep.subr.mxu0 0.0
    %838 = vmatpush1.msra.mxu0 %v705
    %839 = vmatprep.subr.mxu0 0.0
    %840 = vmatpush1.msra.mxu0 %v706
    %841 = vmatprep.subr.mxu0 0.0
    %842 = vmatpush1.msra.mxu0 %v707
    %843 = vmatprep.subr.mxu0 0.0
    %844 = vmatpush1.msra.mxu0 %v708
    %845 = vmatprep.subr.mxu0 0.0
    %846 = vmatpush1.msra.mxu0 %v709
    %847 = vmatprep.subr.mxu0 0.0
    %848 = vmatpush1.msra.mxu0 %v710
    %849 = vmatprep.subr.mxu0 0.0
    %850 = vmatpush1.msra.mxu0 %v711
    %851 = vmatprep.subr.mxu0 0.0
    %852 = vmatpush1.msra.mxu0 %v712
    %853 = vmatprep.subr.mxu0 0.0
    %854 = vmatpush1.msra.mxu0 %v713
    %855 = vmatprep.mubr.f32.mxu0 %v649
    %856 = vmatmul.mubr.f32.gmra.mrb[0].mxu0 %v648
    %v857 = vpop.f32.mrb[0].mxu0
    %v858 = vadd.f32 %v788, %v857
    %v859 = vpop.f32.mrb[0].mxu0
    %860 = vdwg.mxu0
    %861 = vst [vmem:[#allocation8] sm:$0xff] %v858
    // Predicated region
    $region34: #{tpu_custom_call.1} parent=1 // pred_check
      _
    $region35: #{tpu_custom_call.1} parent=1 // pred_check_branch
      %863 = sbr.rel (0) target = $region37
    $region36: #{tpu_custom_call.1} parent=1 // pred_region
      %s865 = ssub.s32 128, 128
      %866 = vsyncadd [#allocation4], %s865
      %s868 = sshll.u32 [#allocation8], 4
      %s869 = int_to_ptr.vmem [resolvable:$true] %s868
      %871 = dma.vmem_to_hbm [thread:$0]  %s869, 128, %s5, [#allocation4]
    $region37: #{tpu_custom_call.1} parent=1 // pred_fallthru
      _
    // Predicated region
    $region38: #{tpu_custom_call.1} parent=1 // pred_check
      _
    $region39: #{tpu_custom_call.1} parent=1 // pred_check_branch
      %873 = sbr.rel (0) target = $region41
    $region40: #{tpu_custom_call.1} parent=1 // pred_region
      %874 = dma.done [#allocation4], 128
    $region41: #{tpu_custom_call.1} parent=1 // pred_fallthru
      _
    %875 = vsyncpa [#allocation3], 1
    %876 = vsyncpa [#allocation6], 1
    %877 = vsyncpa [#allocation4], 1

</llo_original>
